<compile_context>
chip_gen: v7x
topology: tpu7x:2x2x1
jax: 0.10.0
libtpu: 0.0.40
codegen_flags: <defaults>
</compile_context>

<pallas_src>
import functools

import jax
import jax.numpy as jnp
from jax import lax
from jax.experimental import pallas as pl
from jax.experimental.pallas import tpu as pltpu


# Per-grid-step input block target.  2 MiB in + 2 MiB out, double-buffered,
# plus a few block-sized VMEM temporaries stays comfortably inside the 32 MiB
# scoped-VMEM budget requested below (v5e/v6e: 128 MiB physical, v7x: 64 MiB).
# Per-step HBM traffic is ~4 MiB -> ~1.3 us (v7x), ~2.9 us (v6e), ~5 us (v5e),
# which safely hides the ~0.35 us fixed per-grid-step cost on all chips.
_TARGET_BLOCK_BYTES = 2 * 1024 * 1024
_VMEM_LIMIT_BYTES = 32 * 1024 * 1024


def _pick_rows_flat(num_rows, row_bytes):
    """Rows per block for the flattened (B, H*W) fast path.

    The block's second-minor dim must be a multiple of 8 (sublane tiling) or
    equal to the full extent.
    """
    tb = (_TARGET_BLOCK_BYTES // max(row_bytes, 1)) // 8 * 8
    if tb < 8:
        # Very fat rows; the fast-path gate guarantees min(8, B) rows fit.
        return min(8, num_rows)
    if tb < num_rows:
        return tb
    # Whole batch fits in one step.  Split into >=4 grid steps when the batch
    # allows it: with dimension_semantics=("parallel",) the grid axis is
    # sharded across v7x's two TensorCores, so a 1-step grid idles a core and
    # a 2-step grid gives each core a single un-pipelined DMA->compute->DMA
    # sequence.  The extra ~0.35 us/step is noise on single-TC v5e/v6e.
    if num_rows >= 32:
        return max(8, ((num_rows // 4) // 8) * 8)
    if num_rows >= 16 and num_rows % 16 == 0:
        return num_rows // 2
    return num_rows


def _pick_rows_slab(num_rows, row_bytes):
    """Leading-dim rows per block for the (B, H, W) general path."""
    tb = max(1, _TARGET_BLOCK_BYTES // max(row_bytes, 1))
    return min(tb, num_rows)


def _maxpool_k2_flat_kernel(x_ref, o_ref, *, H, W):
    """kernel_size=2 / stride=1 fast path (output spatial size == input).

    Block layout is (TB, H*W): the whole image plane lives on the lane axis,
    so every load, store and VPU max is full-width.  The right/bottom
    replicate padding is realised as lane masks on full-width pltpu.roll
    shifts; the horizontal-max intermediate stays in values (never round-trips
    through o_ref) and o_ref is written exactly once.
    """
    hw = H * W
    x = x_ref[...]                                          # (TB, H*W)
    idx = lax.broadcasted_iota(jnp.int32, x.shape, 1)

    # Pass 1: max with the right neighbour; replicate-clamp at w == W-1.
    right = pltpu.roll(x, shift=hw - 1, axis=1)             # right[p] = x[p+1]
    is_last_col = (idx % W) == (W - 1)
    hmax = jnp.maximum(x, jnp.where(is_last_col, x, right))

    # Pass 2: max with the row below; replicate-clamp at h == H-1.
    below = pltpu.roll(hmax, shift=hw - W, axis=1)          # below[p] = hmax[p+W]
    is_last_row = idx >= (H - 1) * W
    o_ref[...] = jnp.maximum(hmax, jnp.where(is_last_row, hmax, below))


def _axis_window_max(x, k, L, out_L, axis):
    """max_{d in [0,k)} x[..., min(j*(k-1) + d, L-1), ...] for j in [0, out_L)."""
    s = k - 1

    def sl(start, stop, stride):
        starts = [0] * x.ndim
        stops = list(x.shape)
        strides = [1] * x.ndim
        starts[axis], stops[axis], strides[axis] = start, stop, stride
        return lax.slice(x, tuple(starts), tuple(stops), tuple(strides))

    # Interior output positions j in [0, out_L-1): every window index is in
    # bounds ((out_L-2)*s + d <= (out_L-1)*s <= L-1), so no clamp is needed.
    interior = None
    if out_L > 1:
        for d in range(k):
            win = sl(d, d + s * (out_L - 2) + 1, s)
            interior = win if interior is None else jnp.maximum(interior, win)
    # Last output position: clamp window indices to L-1 (replicate padding).
    last = None
    for d in range(k):
        i = min((out_L - 1) * s + d, L - 1)
        win = sl(i, i + 1, 1)
        last = win if last is None else jnp.maximum(last, win)
    if interior is None:
        return last
    return jnp.concatenate([interior, last], axis=axis)


def _maxpool_general_kernel(x_ref, o_ref, *, k, H, W, out_h, out_w):
    """Any kernel_size >= 2 (stride = k - 1), block layout (TB, H, W).

    Separable max (horizontal, then vertical); the replicate padding is folded
    into a clamp of the last output row/column, so no padded copy of the input
    block is ever materialised in VMEM.
    """
    # TODO(synk): darknet only instantiates k == 2 (handled by the lane-dense
    # fast path above); if this path ever becomes hot, make the store
    # lane-dense (flatten out_h*out_w onto lanes) and tile H with a
    # (k-1)-row halo for very large planes.
    x = x_ref[...]                                          # (TB, H, W)
    hmax = _axis_window_max(x, k, W, out_w, axis=2)         # (TB, H, out_w)
    o_ref[...] = _axis_window_max(hmax, k, H, out_h, axis=1)


def maxpool_stride1(x, kernel_size):
    """Pallas implementation of MaxPoolStride1.forward (NCHW input)."""
    if kernel_size < 2:
        raise ValueError(
            "MaxPoolStride1 needs kernel_size >= 2 (kernel_size=1 implies "
            "stride=0, which nn.MaxPool2d rejects)."
        )
    N, C, H, W = x.shape
    k = kernel_size
    s = k - 1                       # pad == stride == k - 1
    out_h = (H - 1) // s + 1        # == ((H + s) - k) // s + 1
    out_w = (W - 1) // s + 1
    B = N * C
    itemsize = jnp.dtype(x.dtype).itemsize
    row_bytes = H * W * itemsize

    cost = pl.CostEstimate(
        flops=(k * k - 1) * B * out_h * out_w,
        transcendentals=0,
        bytes_accessed=(B * H * W + B * out_h * out_w) * itemsize,
    )
    cparams = pltpu.CompilerParams(
        dimension_semantics=("parallel",),
        vmem_limit_bytes=_VMEM_LIMIT_BYTES,
    )

    use_fast = (
        k == 2
        and (H * W) % 128 == 0                       # full-vreg lane rotates
        and min(8, B) * row_bytes <= 2 * _TARGET_BLOCK_BYTES
    )
    if use_fast:
        # Lane-dense fast path for the darknet case.  The NCHW -> (N*C, H*W)
        # reshapes are contiguous, hence free (no extra HBM pass).
        xf = x.reshape(B, H * W)
        tb = _pick_rows_flat(B, row_bytes)
        out = pl.pallas_call(
            functools.partial(_maxpool_k2_flat_kernel, H=H, W=W),
            out_shape=jax.ShapeDtypeStruct((B, H * W), x.dtype),
            grid=(pl.cdiv(B, tb),),
            in_specs=[pl.BlockSpec((tb, H * W), lambda i: (i, 0))],
            out_specs=pl.BlockSpec((tb, H * W), lambda i: (i, 0)),
            compiler_params=cparams,
            cost_estimate=cost,
        )(xf)
        return out.reshape(N, C, H, W)

    # General path (k >= 3, odd spatial sizes, or large single planes).
    if row_bytes > 8 * 1024 * 1024:
        # TODO(synk): tile H with a (k-1)-row halo instead of whole planes.
        raise NotImplementedError(
            "maxpool_stride1 general path: a single (H, W) plane exceeds the "
            "whole-plane VMEM blocking budget; H-tiling not implemented."
        )
    xf = x.reshape(B, H, W)
    tb = _pick_rows_slab(B, row_bytes)
    out = pl.pallas_call(
        functools.partial(
            _maxpool_general_kernel, k=k, H=H, W=W, out_h=out_h, out_w=out_w
        ),
        out_shape=jax.ShapeDtypeStruct((B, out_h, out_w), x.dtype),
        grid=(pl.cdiv(B, tb),),
        in_specs=[pl.BlockSpec((tb, H, W), lambda i: (i, 0, 0))],
        out_specs=pl.BlockSpec((tb, out_h, out_w), lambda i: (i, 0, 0)),
        compiler_params=cparams,
        cost_estimate=cost,
    )(xf)
    return out.reshape(N, C, out_h, out_w)


def _reference(x, kernel_size):
    """Pure-JAX reference matching the PyTorch forward pass."""
    pad = kernel_size - 1
    xp = jnp.pad(x, ((0, 0), (0, 0), (0, pad), (0, pad)), mode="edge")
    return lax.reduce_window(
        xp,
        -jnp.inf,
        lax.max,
        window_dimensions=(1, 1, kernel_size, kernel_size),
        window_strides=(1, 1, pad, pad),
        padding="VALID",
    )


if __name__ == "__main__":
    kernel_size = 2  # darknet's MaxPoolStride1 usage (pad = stride = 1)
    key = jax.random.PRNGKey(0)

    # Primary check: the module's nominal small shape.
    x = jax.random.normal(key, (2, 4, 16, 16), dtype=jnp.float32)
    out = jax.block_until_ready(maxpool_stride1(x, kernel_size))
    ref = _reference(x, kernel_size)
    assert out.shape == ref.shape, (out.shape, ref.shape)
    assert jnp.allclose(out, ref), "mismatch vs reference (small batch)"

    # Secondary check: larger batch so the multi-step grid / megacore split
    # in _pick_rows_flat is exercised (same kernel, grid > 1).
    x2 = jax.random.normal(jax.random.PRNGKey(1), (2, 64, 16, 16), jnp.float32)
    out2 = jax.block_until_ready(maxpool_stride1(x2, kernel_size))
    ref2 = _reference(x2, kernel_size)
    assert out2.shape == ref2.shape, (out2.shape, ref2.shape)
    assert jnp.allclose(out2, ref2), "mismatch vs reference (multi-block grid)"

    print("KERNEL_OK")
</pallas_src>

<mosaic_0001>
module attributes {stable_mosaic.version = 11 : i64} {
  func.func @_maxpool_k2_flat_kernel(%arg0: i32, %arg1: memref<8x256xf32, #tpu.memory_space<vmem>>, %arg2: memref<8x256xf32, #tpu.memory_space<vmem>>) attributes {dimension_semantics = [#tpu.dimension_semantics<parallel>], iteration_bounds = array<i64: 1>, scalar_prefetch = 0 : i64, scratch_operands = 0 : i64, tpu.core_type = #tpu.core_type<tc>, window_params = [{transform_indices = @transform_0, window_bounds = array<i64: 8, 256>}, {transform_indices = @transform_1, window_bounds = array<i64: 8, 256>}]} {
    %c0 = arith.constant 0 : index
    %c0_0 = arith.constant 0 : index
    %0 = vector.load %arg1[%c0, %c0_0] : memref<8x256xf32, #tpu.memory_space<vmem>>, vector<8x256xf32>
    %1 = tpu.iota {dimensions = array<i32: 1>} : vector<8x256xi32>
    %c255_i32 = arith.constant 255 : i32
    %2 = tpu.dynamic_rotate %0 by %c255_i32 dim 1 : vector<8x256xf32>, i32 -> vector<8x256xf32>
    %c16_i32 = arith.constant 16 : i32
    %c0_i32 = arith.constant 0 : i32
    %3 = arith.cmpi eq, %c16_i32, %c0_i32 : i32
    %c1_i32 = arith.constant 1 : i32
    %4 = arith.select %3, %c1_i32, %c16_i32 : i32
    %5 = vector.broadcast %4 : i32 to vector<8x256xi32>
    %6 = arith.remsi %1, %5 : vector<8x256xi32>
    %c0_i32_1 = arith.constant 0 : i32
    %7 = vector.broadcast %c0_i32_1 : i32 to vector<8x256xi32>
    %8 = arith.cmpi ne, %6, %7 : vector<8x256xi32>
    %c0_i32_2 = arith.constant 0 : i32
    %9 = vector.broadcast %c0_i32_2 : i32 to vector<8x256xi32>
    %10 = arith.cmpi slt, %6, %9 : vector<8x256xi32>
    %c0_i32_3 = arith.constant 0 : i32
    %11 = arith.cmpi slt, %4, %c0_i32_3 : i32
    %12 = vector.broadcast %11 : i1 to vector<8x256xi1>
    %13 = vector.broadcast %12 : vector<8x256xi1> to vector<8x256xi1>
    %14 = arith.xori %10, %13 : vector<8x256xi1>
    %15 = arith.andi %14, %8 : vector<8x256xi1>
    %16 = vector.broadcast %4 : i32 to vector<8x256xi32>
    %17 = arith.addi %6, %16 : vector<8x256xi32>
    %18 = arith.select %15, %17, %6 : vector<8x256xi1>, vector<8x256xi32>
    %c15_i32 = arith.constant 15 : i32
    %19 = vector.broadcast %c15_i32 : i32 to vector<8x256xi32>
    %20 = arith.cmpi eq, %18, %19 : vector<8x256xi32>
    %21 = arith.select %20, %0, %2 : vector<8x256xi1>, vector<8x256xf32>
    %22 = arith.maximumf %0, %21 : vector<8x256xf32>
    %c240_i32 = arith.constant 240 : i32
    %23 = tpu.dynamic_rotate %22 by %c240_i32 dim 1 : vector<8x256xf32>, i32 -> vector<8x256xf32>
    %c240_i32_4 = arith.constant 240 : i32
    %24 = vector.broadcast %c240_i32_4 : i32 to vector<8x256xi32>
    %25 = arith.cmpi sge, %1, %24 : vector<8x256xi32>
    %26 = arith.select %25, %22, %23 : vector<8x256xi1>, vector<8x256xf32>
    %27 = arith.maximumf %22, %26 : vector<8x256xf32>
    %c0_5 = arith.constant 0 : index
    %c0_6 = arith.constant 0 : index
    %28 = vector.load %arg2[%c0_5, %c0_6] : memref<8x256xf32, #tpu.memory_space<vmem>>, vector<8x256xf32>
    tpu.vector_store %arg2[%c0_5, %c0_6], %27 {strides = array<i32>} : memref<8x256xf32, #tpu.memory_space<vmem>>, vector<8x256xf32>,
    return
  }
  func.func @transform_0(%arg0: i32) -> (i32, i32) {
    %c0_i32 = arith.constant 0 : i32
    %c0_i32_0 = arith.constant 0 : i32
    return %arg0, %c0_i32 : i32, i32
  }
  func.func @transform_1(%arg0: i32) -> (i32, i32) {
    %c0_i32 = arith.constant 0 : i32
    %c0_i32_0 = arith.constant 0 : i32
    return %arg0, %c0_i32 : i32, i32
  }
}

</mosaic_0001>

<llo_original>
// kernel: tpu_custom_call.1
$region0: #{tpu_custom_call.1}
  #allocation0 [shape = 'u32[]', space=smem, size = 0x4, offset = 0x4, fixed_abs, tag = 'smem constant byte address 0x4 - core index']
  #allocation1 [shape = 'u32[144,128]{1,0:T(1,128)}', space=vmem, size = 0x12000, scoped, tag = 'internal scratch']
  %s0 = inlined_call_operand.hbm [shape: f32[8,256], index: 0, kind: input, shape index: {}]
  %s1 = inlined_call_operand.hbm [shape: f32[8,256], index: 1, kind: output, shape index: {}]
  %s2 = sld [smem:[#allocation0]]
  $region18: #{tpu_custom_call.1} parent=0
    _
  %s4 = ssub.s32 1, %s2
  %s5 = scalar_select 0, %s4, %s2
  $region1: #{tpu_custom_call.1} parent=0
    #allocation2 [shape = 'u8[8192]{0}', space=vmem, size = 0x2000, scoped, tag = 'input window, operand 0, single buffered']
    #allocation3 [shape = 's32[1]{0}', space=sflag, size = 0x4, scoped, tag = 'scoped memory for tpu_custom_call.1']
    #allocation4 [shape = 's32[1]{0}', space=sflag, size = 0x4, scoped, tag = 'scoped memory for tpu_custom_call.1']
    #allocation5 [shape = 'u8[8192]{0}', space=vmem, size = 0x2000, scoped, tag = 'output window, operand 0, single buffered']
    %6 = vsyncpa [#allocation3], 0
    %7 = vsyncpa [#allocation4], 0
    // Predicated region
    $region2: #{tpu_custom_call.1} parent=1 // pred_check
      _
    $region3: #{tpu_custom_call.1} parent=1 // pred_check_branch
      %9 = sbr.rel (0) target = $region5
    $region4: #{tpu_custom_call.1} parent=1 // pred_region
      %s11 = ssub.s32 256, 256
      %12 = vsyncadd [#allocation3], %s11
      %s14 = sshll.u32 [#allocation2], 4
      %s15 = int_to_ptr.vmem [resolvable:$true] %s14
      %17 = dma.hbm_to_vmem [thread:$0]  %s0, 256, %s15, [#allocation3]
    $region5: #{tpu_custom_call.1} parent=1 // pred_fallthru
      _
    // Predicated region
    $region6: #{tpu_custom_call.1} parent=1 // pred_check
      _
    $region7: #{tpu_custom_call.1} parent=1 // pred_check_branch
      %19 = sbr.rel (0) target = $region9
    $region8: #{tpu_custom_call.1} parent=1 // pred_region
      %20 = dma.done [#allocation3], 256
    $region9: #{tpu_custom_call.1} parent=1 // pred_fallthru
      _
    %v21 = vld [vmem:[#allocation2] sm:$0xff]
    %v22 = vld [vmem:[#allocation2 + $0x8] sm:$0xff]
    %v23 = vlaneseq
    %v24 = vand.u32 %v23, 127
    %v25 = vadd.s32 %v24, 128
    %26 = vrot.lane.b32.xlu0 %v21, 127
    %v27 = vpop.permute.xlu0 %26
    %28 = vrot.lane.b32.xlu0 %v22, 127
    %v29 = vpop.permute.xlu0 %28
    %vm30 = vcmp.lt.s32.totalorder %v24, 127
    %v31 = vsel %vm30, %v27, %v29
    %v32 = vsel %vm30, %v29, %v27
    %vm33 = vcmp.lt.s32.totalorder %v24, 0
    %v34 = vsub.s32 0, %v24
    %v35 = vsel %vm33, %v34, %v24
    %v36 = vshrl.u32 %v35, 4
    %v37 = vand.u32 %v35, 15
    %v38 = vsub.s32 0, %v37
    %v39 = vsel %vm33, %v38, %v37
    %vm40 = vcmp.lt.s32.totalorder %v25, 0
    %v41 = vsub.s32 0, %v25
    %v42 = vsel %vm40, %v41, %v25
    %v43 = vshrl.u32 %v42, 4
    %v44 = vand.u32 %v42, 15
    %v45 = vsub.s32 0, %v44
    %v46 = vsel %vm40, %v45, %v44
    %vm47 = vcmp.ne.s32.totalorder %v39, 0
    %vm48 = vcmp.ne.s32.totalorder %v46, 0
    %vm49 = vcmp.lt.s32.totalorder %v39, 0
    %vm50 = vcmp.lt.s32.totalorder %v46, 0
    %vm51 = vmand %vm49, %vm47
    %vm52 = vmand %vm50, %vm48
    %v53 = vadd.s32 %v39, 16
    %v54 = vadd.s32 %v46, 16
    %v55 = vsel %vm51, %v53, %v39
    %v56 = vsel %vm52, %v54, %v46
    %vm57 = vcmp.eq.s32.totalorder %v55, 15
    %vm58 = vcmp.eq.s32.totalorder %v56, 15
    %v59 = vsel %vm57, %v21, %v31
    %v60 = vsel %vm58, %v22, %v32
    %v61 = vmax.f32 %v21, %v59
    %v62 = vmax.f32 %v22, %v60
    %63 = vrot.lane.b32.xlu0 %v61, 112
    %v64 = vpop.permute.xlu0 %63
    %65 = vrot.lane.b32.xlu0 %v62, 112
    %v66 = vpop.permute.xlu0 %65
    %vm67 = vcmp.lt.s32.totalorder %v24, 112
    %v68 = vsel %vm67, %v64, %v66
    %v69 = vsel %vm67, %v66, %v64
    %vm70 = vcmp.ge.s32.totalorder %v24, 240
    %vm71 = vcmp.ge.s32.totalorder %v25, 240
    %v72 = vsel %vm70, %v61, %v68
    %v73 = vsel %vm71, %v62, %v69
    %v74 = vmax.f32 %v61, %v72
    %v75 = vmax.f32 %v62, %v73
    %76 = vst [vmem:[#allocation5] sm:$0xff] %v74
    %77 = vst [vmem:[#allocation5 + $0x8] sm:$0xff] %v75
    // Predicated region
    $region10: #{tpu_custom_call.1} parent=1 // pred_check
      _
    $region11: #{tpu_custom_call.1} parent=1 // pred_check_branch
      %79 = sbr.rel (0) target = $region13
    $region12: #{tpu_custom_call.1} parent=1 // pred_region
      %s81 = ssub.s32 256, 256
      %82 = vsyncadd [#allocation4], %s81
      %s84 = sshll.u32 [#allocation5], 4
      %s85 = int_to_ptr.vmem [resolvable:$true] %s84
      %87 = dma.vmem_to_hbm [thread:$0]  %s85, 256, %s1, [#allocation4]
    $region13: #{tpu_custom_call.1} parent=1 // pred_fallthru
      _
    // Predicated region
    $region14: #{tpu_custom_call.1} parent=1 // pred_check
      _
    $region15: #{tpu_custom_call.1} parent=1 // pred_check_branch
      %89 = sbr.rel (0) target = $region17
    $region16: #{tpu_custom_call.1} parent=1 // pred_region
      %90 = dma.done [#allocation4], 256
    $region17: #{tpu_custom_call.1} parent=1 // pred_fallthru
      _
    %91 = vsyncpa [#allocation3], 1
    %92 = vsyncpa [#allocation4], 1

</llo_original>
